<compile_context>
chip_gen: v6e
topology: v6e:2x2x1
jax: 0.10.0
libtpu: 0.0.40
codegen_flags: <defaults>
</compile_context>

<pallas_src>
import jax
import jax.numpy as jnp
from jax.experimental import pallas as pl
from jax.experimental.pallas import tpu as pltpu

EPS = 1e-5

_VMEM_LIMIT = 32 * 1024 * 1024    # explicit scoped-VMEM limit: safe on v5e/v6e/v7x
_TILE_BUDGET = 3 * 1024 * 1024    # max bytes per x-block (in+out double-buffered ~= 4x)


def _round_up(x, m):
    return ((x + m - 1) // m) * m


# --------------------------------------------------------------------------
# Kernel 1: normalize the last dim of an (N, C) slab (module semantics).
# --------------------------------------------------------------------------
def _ln_lastdim_kernel(x_ref, w_ref, b_ref, o_ref):
    x = x_ref[...].astype(jnp.float32)                 # (tm, C)
    mu = jnp.mean(x, axis=-1, keepdims=True)
    xc = x - mu
    var = jnp.mean(xc * xc, axis=-1, keepdims=True)    # biased variance
    inv = jax.lax.rsqrt(var + EPS)
    w = w_ref[...].astype(jnp.float32)                 # (1, C)
    b = b_ref[...].astype(jnp.float32)
    o_ref[...] = (xc * inv * w + b).astype(o_ref.dtype)


def withbias_layernorm_lastdim(x, weight, bias, *, tm=1024):
    """LayerNorm over the last dim of x (any rank) == PyTorch WithBias_LayerNorm."""
    orig_shape = x.shape
    C = orig_shape[-1]
    x2 = x.reshape(-1, C)
    N = x2.shape[0]
    itemsize = max(jnp.dtype(x.dtype).itemsize, 4)

    # Largest row tile that fits the VMEM budget ...
    tm_eff = min(tm, max(8, _TILE_BUDGET // (C * itemsize)))
    # ... but keep >= 2 grid steps when there is enough work (v7x: 2 TensorCores).
    if N >= 16:
        tm_eff = min(tm_eff, _round_up(pl.cdiv(N, 2), 8))
    tm_eff = max(8, _round_up(min(tm_eff, _round_up(N, 8)), 8))

    grid = (pl.cdiv(N, tm_eff),)                       # tail tile is masked, no assert
    w2 = weight.reshape(1, C)
    b2 = bias.reshape(1, C)

    y2 = pl.pallas_call(
        _ln_lastdim_kernel,
        out_shape=jax.ShapeDtypeStruct((N, C), x.dtype),
        grid=grid,
        in_specs=[
            pl.BlockSpec((tm_eff, C), lambda i: (i, 0)),
            pl.BlockSpec((1, C), lambda i: (0, 0)),
            pl.BlockSpec((1, C), lambda i: (0, 0)),
        ],
        out_specs=pl.BlockSpec((tm_eff, C), lambda i: (i, 0)),
        compiler_params=pltpu.CompilerParams(
            dimension_semantics=("parallel",),
            vmem_limit_bytes=_VMEM_LIMIT,
        ),
    )(x2, w2, b2)
    return y2.reshape(orig_shape)


# --------------------------------------------------------------------------
# Kernel 2: DemosaicFormer usage — channel LayerNorm directly on NCHW layout
# (removes the two full-tensor HBM transposes of the previous version).
# --------------------------------------------------------------------------
def _ln_nchw_kernel(x_ref, w_ref, b_ref, o_ref):
    x = x_ref[...].astype(jnp.float32)                 # (C, TH, TW), W on lanes
    mu = jnp.mean(x, axis=0, keepdims=True)            # cross-plane VPU adds, no XLU
    xc = x - mu
    var = jnp.mean(xc * xc, axis=0, keepdims=True)
    inv = jax.lax.rsqrt(var + EPS)
    w = w_ref[...].astype(jnp.float32)                 # (C, 1, 1) -> broadcast
    b = b_ref[...].astype(jnp.float32)
    o_ref[...] = (xc * inv * w + b).astype(o_ref.dtype)


def withbias_layernorm_nchw(x, weight, bias):
    """LayerNorm over channels of an NCHW tensor, computed in NCHW layout."""
    B, C, H, W = x.shape
    itemsize = max(jnp.dtype(x.dtype).itemsize, 4)

    # Lane (last) axis: lane-dense multiple of 128 when possible, else full W.
    tw = min(W, 512) if W % 128 == 0 else W
    # Sublane (second-last) axis, shrunk to stay inside the VMEM tile budget.
    if H % 8 == 0:
        th = min(H, 64)
        while th > 8 and C * th * tw * itemsize > _TILE_BUDGET:
            th //= 2
    else:
        th = H
    if W % 128 == 0:
        while tw > 128 and C * th * tw * itemsize > _TILE_BUDGET:
            tw //= 2

    grid = (B, pl.cdiv(H, th), pl.cdiv(W, tw))
    w3 = weight.reshape(C, 1, 1)
    b3 = bias.reshape(C, 1, 1)

    return pl.pallas_call(
        _ln_nchw_kernel,
        out_shape=jax.ShapeDtypeStruct((B, C, H, W), x.dtype),
        grid=grid,
        in_specs=[
            pl.BlockSpec((None, C, th, tw), lambda b, i, j: (b, 0, i, j)),
            pl.BlockSpec((C, 1, 1), lambda b, i, j: (0, 0, 0)),
            pl.BlockSpec((C, 1, 1), lambda b, i, j: (0, 0, 0)),
        ],
        out_specs=pl.BlockSpec((None, C, th, tw), lambda b, i, j: (b, 0, i, j)),
        compiler_params=pltpu.CompilerParams(
            dimension_semantics=("parallel", "parallel", "parallel"),
            vmem_limit_bytes=_VMEM_LIMIT,
        ),
    )(x, w3, b3)


# --------------------------------------------------------------------------
# References
# --------------------------------------------------------------------------
def _ref_lastdim(x, w, b):
    xf = x.astype(jnp.float32)
    mu = jnp.mean(xf, axis=-1, keepdims=True)
    var = jnp.mean((xf - mu) ** 2, axis=-1, keepdims=True)
    return ((xf - mu) / jnp.sqrt(var + EPS) * w + b).astype(x.dtype)


def _ref_nchw(x, w, b):
    xf = x.astype(jnp.float32)
    mu = jnp.mean(xf, axis=1, keepdims=True)
    var = jnp.mean((xf - mu) ** 2, axis=1, keepdims=True)
    y = (xf - mu) / jnp.sqrt(var + EPS) * w[None, :, None, None] + b[None, :, None, None]
    return y.astype(x.dtype)


if __name__ == "__main__":
    key = jax.random.PRNGKey(0)
    kx, kw, kb, kx2, kw2, kb2 = jax.random.split(key, 6)

    # DemosaicFormer-style NCHW activation, layernormed over channels (no transposes).
    B, C, H, W = 2, 32, 8, 8
    x = jax.random.normal(kx, (B, C, H, W), dtype=jnp.float32)
    weight = jnp.ones((C,), jnp.float32) + 0.1 * jax.random.normal(kw, (C,), jnp.float32)
    bias = 0.1 * jax.random.normal(kb, (C,), jnp.float32)

    out = jax.block_until_ready(withbias_layernorm_nchw(x, weight, bias))
    ref = _ref_nchw(x, weight, bias)
    assert out.shape == (B, C, H, W)
    assert jnp.allclose(out, ref, atol=1e-5, rtol=1e-5), "NCHW mismatch vs reference"

    # Plain module semantics (normalize last dim); N=37 exercises the masked
    # tail-tile path (no divisibility assert anymore).
    N2, C2 = 37, 64
    x2 = jax.random.normal(kx2, (N2, C2), dtype=jnp.float32)
    w2 = jnp.ones((C2,), jnp.float32) + 0.1 * jax.random.normal(kw2, (C2,), jnp.float32)
    b2 = 0.1 * jax.random.normal(kb2, (C2,), jnp.float32)

    out2 = jax.block_until_ready(withbias_layernorm_lastdim(x2, w2, b2))
    ref2 = _ref_lastdim(x2, w2, b2)
    assert out2.shape == (N2, C2)
    assert jnp.allclose(out2, ref2, atol=1e-5, rtol=1e-5), "last-dim mismatch vs reference"

    print("KERNEL_OK")
</pallas_src>

<mosaic_0001>
module attributes {stable_mosaic.version = 11 : i64} {
  func.func @_ln_nchw_kernel(%arg0: i32, %arg1: i32, %arg2: i32, %arg3: memref<1x32x8x8xf32, #tpu.memory_space<vmem>>, %arg4: memref<32x1x1xf32, #tpu.memory_space<vmem>>, %arg5: memref<32x1x1xf32, #tpu.memory_space<vmem>>, %arg6: memref<1x32x8x8xf32, #tpu.memory_space<vmem>>) attributes {dimension_semantics = [#tpu.dimension_semantics<parallel>, #tpu.dimension_semantics<parallel>, #tpu.dimension_semantics<parallel>], iteration_bounds = array<i64: 2, 1, 1>, scalar_prefetch = 0 : i64, scratch_operands = 0 : i64, tpu.core_type = #tpu.core_type<tc>, window_params = [{transform_indices = @transform_0, window_bounds = array<i64: 1, 32, 8, 8>}, {pipeline_mode = #tpu.pipeline_mode<synchronous>, transform_indices = @transform_1, window_bounds = array<i64: 32, 1, 1>}, {pipeline_mode = #tpu.pipeline_mode<synchronous>, transform_indices = @transform_2, window_bounds = array<i64: 32, 1, 1>}, {transform_indices = @transform_3, window_bounds = array<i64: 1, 32, 8, 8>}]} {
    %c0 = arith.constant 0 : index
    %c0_0 = arith.constant 0 : index
    %c0_1 = arith.constant 0 : index
    %c0_2 = arith.constant 0 : index
    %0 = vector.load %arg3[%c0, %c0_0, %c0_1, %c0_2] : memref<1x32x8x8xf32, #tpu.memory_space<vmem>>, vector<1x32x8x8xf32>
    %1 = vector.shape_cast %0 : vector<1x32x8x8xf32> to vector<32x8x8xf32>
    %cst = arith.constant dense<0.000000e+00> : vector<8x8xf32>
    %2 = vector.multi_reduction <add>, %1, %cst [0] : vector<32x8x8xf32> to vector<8x8xf32>
    %3 = vector.shape_cast %2 : vector<8x8xf32> to vector<1x8x8xf32>
    %cst_3 = arith.constant 3.200000e+01 : f32
    %4 = vector.broadcast %cst_3 : f32 to vector<1x8x8xf32>
    %5 = arith.divf %3, %4 : vector<1x8x8xf32>
    %6 = vector.broadcast %5 : vector<1x8x8xf32> to vector<32x8x8xf32>
    %7 = arith.subf %1, %6 : vector<32x8x8xf32>
    %8 = arith.mulf %7, %7 : vector<32x8x8xf32>
    %cst_4 = arith.constant dense<0.000000e+00> : vector<8x8xf32>
    %9 = vector.multi_reduction <add>, %8, %cst_4 [0] : vector<32x8x8xf32> to vector<8x8xf32>
    %10 = vector.shape_cast %9 : vector<8x8xf32> to vector<1x8x8xf32>
    %cst_5 = arith.constant 3.200000e+01 : f32
    %11 = vector.broadcast %cst_5 : f32 to vector<1x8x8xf32>
    %12 = arith.divf %10, %11 : vector<1x8x8xf32>
    %cst_6 = arith.constant 9.99999974E-6 : f32
    %13 = vector.broadcast %cst_6 : f32 to vector<1x8x8xf32>
    %14 = arith.addf %12, %13 : vector<1x8x8xf32>
    %15 = math.rsqrt %14 : vector<1x8x8xf32>
    %c0_7 = arith.constant 0 : index
    %c0_8 = arith.constant 0 : index
    %c0_9 = arith.constant 0 : index
    %16 = vector.load %arg4[%c0_7, %c0_8, %c0_9] : memref<32x1x1xf32, #tpu.memory_space<vmem>>, vector<32x1x1xf32>
    %c0_10 = arith.constant 0 : index
    %c0_11 = arith.constant 0 : index
    %c0_12 = arith.constant 0 : index
    %17 = vector.load %arg5[%c0_10, %c0_11, %c0_12] : memref<32x1x1xf32, #tpu.memory_space<vmem>>, vector<32x1x1xf32>
    %18 = vector.broadcast %15 : vector<1x8x8xf32> to vector<32x8x8xf32>
    %19 = arith.mulf %7, %18 : vector<32x8x8xf32>
    %20 = vector.broadcast %16 : vector<32x1x1xf32> to vector<32x8x8xf32>
    %21 = arith.mulf %19, %20 : vector<32x8x8xf32>
    %22 = vector.broadcast %17 : vector<32x1x1xf32> to vector<32x8x8xf32>
    %23 = arith.addf %21, %22 : vector<32x8x8xf32>
    %c0_13 = arith.constant 0 : index
    %c0_14 = arith.constant 0 : index
    %c0_15 = arith.constant 0 : index
    %c0_16 = arith.constant 0 : index
    %24 = vector.load %arg6[%c0_13, %c0_14, %c0_15, %c0_16] : memref<1x32x8x8xf32, #tpu.memory_space<vmem>>, vector<1x32x8x8xf32>
    %25 = vector.shape_cast %24 : vector<1x32x8x8xf32> to vector<32x8x8xf32>
    %26 = vector.shape_cast %23 : vector<32x8x8xf32> to vector<1x32x8x8xf32>
    tpu.vector_store %arg6[%c0_13, %c0_14, %c0_15, %c0_16], %26 {strides = array<i32>} : memref<1x32x8x8xf32, #tpu.memory_space<vmem>>, vector<1x32x8x8xf32>,
    return
  }
  func.func @transform_0(%arg0: i32, %arg1: i32, %arg2: i32) -> (i32, i32, i32, i32) {
    %c0_i32 = arith.constant 0 : i32
    %c0_i32_0 = arith.constant 0 : i32
    return %arg0, %c0_i32, %arg1, %arg2 : i32, i32, i32, i32
  }
  func.func @transform_1(%arg0: i32, %arg1: i32, %arg2: i32) -> (i32, i32, i32) {
    %c0_i32 = arith.constant 0 : i32
    %c0_i32_0 = arith.constant 0 : i32
    %c0_i32_1 = arith.constant 0 : i32
    %c0_i32_2 = arith.constant 0 : i32
    return %c0_i32, %c0_i32_0, %c0_i32_1 : i32, i32, i32
  }
  func.func @transform_2(%arg0: i32, %arg1: i32, %arg2: i32) -> (i32, i32, i32) {
    %c0_i32 = arith.constant 0 : i32
    %c0_i32_0 = arith.constant 0 : i32
    %c0_i32_1 = arith.constant 0 : i32
    %c0_i32_2 = arith.constant 0 : i32
    return %c0_i32, %c0_i32_0, %c0_i32_1 : i32, i32, i32
  }
  func.func @transform_3(%arg0: i32, %arg1: i32, %arg2: i32) -> (i32, i32, i32, i32) {
    %c0_i32 = arith.constant 0 : i32
    %c0_i32_0 = arith.constant 0 : i32
    return %arg0, %c0_i32, %arg1, %arg2 : i32, i32, i32, i32
  }
}

</mosaic_0001>

<llo_original>
// kernel: tpu_custom_call.1
$region0: #{tpu_custom_call.1}
  #allocation0 [shape = 'u32[]', space=smem, size = 0x4, offset = 0x4, fixed_abs, tag = 'smem constant byte address 0x4 - core index']
  #allocation1 [shape = 'u32[144,128]{1,0:T(1,128)}', space=vmem, size = 0x12000, scoped, tag = 'internal scratch']
  %s0 = inlined_call_operand.vmem [shape: f32[2,32,8,8], index: 0, kind: input, shape index: {}]
  %s1 = inlined_call_operand.vmem [shape: f32[32,1,1], index: 1, kind: input, shape index: {}]
  %s2 = inlined_call_operand.vmem [shape: f32[32,1,1], index: 2, kind: input, shape index: {}]
  %s3 = inlined_call_operand.vmem [shape: f32[2,32,8,8], index: 3, kind: output, shape index: {}]
  %s4 = sld [smem:[#allocation0]]
  $region45: #{tpu_custom_call.1} parent=0
    _
  %s6 = ssub.s32 1, %s4
  %s7 = scalar_select 0, %s6, %s4
  loop: start=0, step=1, limit=4
  $region2: #{tpu_custom_call.1} parent=0 // loop_pre_header
    _
  $region3: #{tpu_custom_call.1} parent=0 // loop_header
    %s9 = sphi 0, %s13
    %p10 = scmp.ge.s32.totalorder %s9, 4
    %s16 = sphi 0, %s35
    %s17 = sphi 0, %s31
    %s18 = sphi 0, %s27
    %s19 = sphi 0, %s16
    %s20 = sphi 0, %s17
    %s21 = sphi 0, %s18
    %s22 = sphi 0, %s19
    %s23 = sphi 0, %s20
    %s24 = sphi 0, %s21
    %s42 = sphi 0, %s44
    %s45 = sphi 0, %s42
    %s46 = sphi 0, %s45
    %s62 = sphi 0, %s46
    %s66 = sphi 0, %s66
    %s68 = sphi 0, %s66
    %s69 = sphi 0, %s68
    %s83 = sphi 0, %s69
    %s87 = sphi 0, %s87
    %s89 = sphi 0, %s87
    %s90 = sphi 0, %s89
    %s104 = sphi 0, %s90
    %s114 = sphi 0, %s116
    %s117 = sphi 0, %s114
    %s118 = sphi 0, %s117
    %s134 = sphi 0, %s118
  $region4: #{tpu_custom_call.1} parent=0 // loop_header_branch
    %12 = sbr.rel (%p10) target = $region8
  $region5: #{tpu_custom_call.1} parent=0 // loop_body
    %s14 = ssub.s32 %s9, 1
    %s15 = ssub.s32 %s9, 2
    %s25 = sadd.s32 1, %s18
    %p26 = scmp.ge.s32.totalorder %s25, 1
    %s27 = scalar_select %p26, 0, %s25
    %s28 = sadd.s32 1, %s17
    %s29 = scalar_select %p26, %s28, %s17
    %p30 = scmp.ge.s32.totalorder %s29, 1
    %s31 = scalar_select %p30, 0, %s29
    %s32 = sadd.s32 1, %s16
    %s33 = scalar_select %p30, %s32, %s16
    %p34 = scmp.ge.s32.totalorder %s33, 2
    %s35 = scalar_select %p34, 0, %s33
    %s36 = ssub.s32 %s16, %s35
    %s37 = ssub.s32 %s17, %s31
    %s38 = sor.u32 %s36, %s37
    %s39 = ssub.s32 %s18, %s27
    %s40 = sor.u32 %s38, %s39
    %p41 = scmp.eq.s32.totalorder %s40, 0
    %s43 = sadd.s32 %s42, 1
    %s44 = scalar_select %p41, %s42, %s43
    %p47 = pneg %p41
    %p48 = scmp.eq.s32.totalorder %s9, 1
    %p49 = por %p47, %p48
    %p50 = scmp.ne.s32.totalorder %s42, %s45
    %p51 = scmp.eq.s32.totalorder %s9, 0
    %p52 = por %p50, %p51
    %p53 = scmp.ne.s32.totalorder %s42, %s45
    %p54 = scmp.eq.s32.totalorder %s14, 1
    %p55 = por %p53, %p54
    %p56 = scmp.ne.s32.totalorder %s45, %s46
    %p57 = scmp.eq.s32.totalorder %s14, 0
    %p58 = por %p56, %p57
    %p59 = scmp.ne.s32.totalorder %s45, %s46
    %p60 = scmp.eq.s32.totalorder %s15, 1
    %p61 = por %p59, %p60
    %p63 = scmp.ne.s32.totalorder %s46, %s62
    %p64 = scmp.eq.s32.totalorder %s15, 0
    %p65 = por %p63, %p64
    %s67 = sadd.s32 %s66, 1
    %p70 = scmp.eq.s32.totalorder %s9, 1
    %p71 = scmp.ne.s32.totalorder %s66, %s68
    %p72 = scmp.eq.s32.totalorder %s9, 0
    %p73 = por %p71, %p72
    %p74 = scmp.ne.s32.totalorder %s66, %s68
    %p75 = scmp.eq.s32.totalorder %s14, 1
    %p76 = por %p74, %p75
    %p77 = scmp.ne.s32.totalorder %s68, %s69
    %p78 = scmp.eq.s32.totalorder %s14, 0
    %p79 = por %p77, %p78
    %p80 = scmp.ne.s32.totalorder %s68, %s69
    %p81 = scmp.eq.s32.totalorder %s15, 1
    %p82 = por %p80, %p81
    %p84 = scmp.ne.s32.totalorder %s69, %s83
    %p85 = scmp.eq.s32.totalorder %s15, 0
    %p86 = por %p84, %p85
    %s88 = sadd.s32 %s87, 1
    %p91 = scmp.eq.s32.totalorder %s9, 1
    %p92 = scmp.ne.s32.totalorder %s87, %s89
    %p93 = scmp.eq.s32.totalorder %s9, 0
    %p94 = por %p92, %p93
    %p95 = scmp.ne.s32.totalorder %s87, %s89
    %p96 = scmp.eq.s32.totalorder %s14, 1
    %p97 = por %p95, %p96
    %p98 = scmp.ne.s32.totalorder %s89, %s90
    %p99 = scmp.eq.s32.totalorder %s14, 0
    %p100 = por %p98, %p99
    %p101 = scmp.ne.s32.totalorder %s89, %s90
    %p102 = scmp.eq.s32.totalorder %s15, 1
    %p103 = por %p101, %p102
    %p105 = scmp.ne.s32.totalorder %s90, %s104
    %p106 = scmp.eq.s32.totalorder %s15, 0
    %p107 = por %p105, %p106
    %s108 = ssub.s32 %s16, %s35
    %s109 = ssub.s32 %s17, %s31
    %s110 = sor.u32 %s108, %s109
    %s111 = ssub.s32 %s18, %s27
    %s112 = sor.u32 %s110, %s111
    %p113 = scmp.eq.s32.totalorder %s112, 0
    %s115 = sadd.s32 %s114, 1
    %s116 = scalar_select %p113, %s114, %s115
    %p119 = pneg %p113
    %p120 = scmp.eq.s32.totalorder %s9, 1
    %p121 = por %p119, %p120
    %p122 = scmp.ne.s32.totalorder %s114, %s117
    %p123 = scmp.eq.s32.totalorder %s9, 0
    %p124 = por %p122, %p123
    %p125 = scmp.ne.s32.totalorder %s114, %s117
    %p126 = scmp.eq.s32.totalorder %s14, 1
    %p127 = por %p125, %p126
    %p128 = scmp.ne.s32.totalorder %s117, %s118
    %p129 = scmp.eq.s32.totalorder %s14, 0
    %p130 = por %p128, %p129
    %p131 = scmp.ne.s32.totalorder %s117, %s118
    %p132 = scmp.eq.s32.totalorder %s15, 1
    %p133 = por %p131, %p132
    %p135 = scmp.ne.s32.totalorder %s118, %s134
    %p136 = scmp.eq.s32.totalorder %s15, 0
    %p137 = por %p135, %p136
    %p138 = scmp.le.s32.totalorder 1, %s9
    %p139 = scmp.lt.s32.totalorder %s9, 3
    %p140 = pnand %p138, %p139
    %p141 = pneg %p140
    // Predicated region
    $region9: #{tpu_custom_call.1} parent=5 // pred_check
      _
    $region10: #{tpu_custom_call.1} parent=5 // pred_check_branch
      %143 = sbr.rel (%p140) target = $region12
    $region11: #{tpu_custom_call.1} parent=5 // pred_region
      %s144 = ssub.s32 %s9, 1
      // Predicated region
      $region13: #{tpu_custom_call.1} parent=11 // pred_check
        %p145 = pneg %p79
      $region14: #{tpu_custom_call.1} parent=11 // pred_check_branch
        %147 = sbr.rel (%p145) target = $region16
      $region15: #{tpu_custom_call.1} parent=11 // pred_region
        _
      $region16: #{tpu_custom_call.1} parent=11 // pred_fallthru
        _
      // Predicated region
      $region17: #{tpu_custom_call.1} parent=11 // pred_check
        %p148 = pneg %p100
      $region18: #{tpu_custom_call.1} parent=11 // pred_check_branch
        %150 = sbr.rel (%p148) target = $region20
      $region19: #{tpu_custom_call.1} parent=11 // pred_region
        _
      $region20: #{tpu_custom_call.1} parent=11 // pred_fallthru
        _
    $region12: #{tpu_custom_call.1} parent=5 // pred_fallthru
      _
    %p151 = scmp.lt.s32.totalorder %s9, 2
    // Predicated region
    $region21: #{tpu_custom_call.1} parent=5 // pred_check
      %p152 = pneg %p151
    $region22: #{tpu_custom_call.1} parent=5 // pred_check_branch
      %154 = sbr.rel (%p152) target = $region24
    $region23: #{tpu_custom_call.1} parent=5 // pred_region
      // Predicated region
      $region25: #{tpu_custom_call.1} parent=23 // pred_check
        %p155 = pneg %p52
      $region26: #{tpu_custom_call.1} parent=23 // pred_check_branch
        %157 = sbr.rel (%p155) target = $region28
      $region27: #{tpu_custom_call.1} parent=23 // pred_region
        %p158 = scmp.lt.s32.totalorder %s16, 1
        %s159 = scalar_select %p158, %s16, 1
        %p160 = scmp.lt.s32.totalorder %s17, 0
        %s161 = scalar_select %p160, %s17, 0
        %p162 = scmp.lt.s32.totalorder %s18, 0
        %s163 = scalar_select %p162, %s18, 0
        %s164 = sadd.s32 %s163, %s161
        %s165 = smul.addr %s159, 32
        %s166 = sadd.s32 %s164, %s165
        %s167 = smul.addr %s166, 8
        %s168 = scalar_lea.vmem %s0, %s167
      $region28: #{tpu_custom_call.1} parent=23 // pred_fallthru
        _
    $region24: #{tpu_custom_call.1} parent=5 // pred_fallthru
      _
    %p169 = scmp.le.s32.totalorder 1, %s9
    %p170 = scmp.lt.s32.totalorder %s9, 3
    %p171 = pnand %p169, %p170
    %p172 = pneg %p171
    // Predicated region
    $region29: #{tpu_custom_call.1} parent=5 // pred_check
      _
    $region30: #{tpu_custom_call.1} parent=5 // pred_check_branch
      %174 = sbr.rel (%p171) target = $region32
    $region31: #{tpu_custom_call.1} parent=5 // pred_region
      %s175 = ssub.s32 %s9, 1
      %p176 = scmp.lt.s32.totalorder %s19, 1
      %s177 = scalar_select %p176, %s19, 1
      %p178 = scmp.lt.s32.totalorder %s20, 0
      %s179 = scalar_select %p178, %s20, 0
      %p180 = scmp.lt.s32.totalorder %s21, 0
      %s181 = scalar_select %p180, %s21, 0
      %s182 = sadd.s32 %s181, %s179
      %s183 = smul.addr %s177, 32
      %s184 = sadd.s32 %s182, %s183
      %s185 = smul.addr %s184, 8
      %s186 = scalar_lea.vmem %s0, %s185
      %p187 = pneg %p58
      %p188 = pneg %p55
      %p189 = pneg %p79
      %p190 = pneg %p76
      %p191 = pneg %p100
      %p192 = pneg %p97
      %p193 = pneg %p130
      %p194 = pneg %p127
      %p195 = scmp.lt.s32.totalorder %s19, 1
      %s196 = scalar_select %p195, %s19, 1
      %p197 = scmp.lt.s32.totalorder %s20, 0
      %s198 = scalar_select %p197, %s20, 0
      %p199 = scmp.lt.s32.totalorder %s21, 0
      %s200 = scalar_select %p199, %s21, 0
      %s201 = sadd.s32 %s200, %s198
      %s202 = smul.addr %s196, 32
      %s203 = sadd.s32 %s201, %s202
      %s204 = smul.addr %s203, 8
      %s205 = scalar_lea.vmem %s3, %s204
      %p206 = scmp.lt.s32.totalorder %s19, 1
      %s207 = scalar_select %p206, %s19, 1
      %p208 = scmp.lt.s32.totalorder %s20, 0
      %s209 = scalar_select %p208, %s20, 0
      %p210 = scmp.lt.s32.totalorder %s21, 0
      %s211 = scalar_select %p210, %s21, 0
      %s212 = sadd.s32 %s211, %s209
      %s213 = smul.addr %s207, 32
      %s214 = sadd.s32 %s212, %s213
      %s215 = smul.addr %s214, 8
      %s216 = scalar_lea.vmem %s0, %s215
      %p217 = scmp.lt.s32.totalorder %s19, 1
      %s218 = scalar_select %p217, %s19, 1
      %p219 = scmp.lt.s32.totalorder %s20, 0
      %s220 = scalar_select %p219, %s20, 0
      %p221 = scmp.lt.s32.totalorder %s21, 0
      %s222 = scalar_select %p221, %s21, 0
      %s223 = sadd.s32 %s222, %s220
      %s224 = smul.addr %s218, 32
      %s225 = sadd.s32 %s223, %s224
      %s226 = smul.addr %s225, 8
      %s227 = scalar_lea.vmem %s3, %s226
      %v228 = vld [vmem:[%s216] sm:$0xff]
      %v229 = vld [vmem:[%s216 + $0x8] sm:$0xff]
      %v230 = vld [vmem:[%s216 + $0x10] sm:$0xff]
      %v231 = vld [vmem:[%s216 + $0x18] sm:$0xff]
      %v232 = vld [vmem:[%s216 + $0x20] sm:$0xff]
      %v233 = vld [vmem:[%s216 + $0x28] sm:$0xff]
      %v234 = vld [vmem:[%s216 + $0x30] sm:$0xff]
      %v235 = vld [vmem:[%s216 + $0x38] sm:$0xff]
      %v236 = vld [vmem:[%s216 + $0x40] sm:$0xff]
      %v237 = vld [vmem:[%s216 + $0x48] sm:$0xff]
      %v238 = vld [vmem:[%s216 + $0x50] sm:$0xff]
      %v239 = vld [vmem:[%s216 + $0x58] sm:$0xff]
      %v240 = vld [vmem:[%s216 + $0x60] sm:$0xff]
      %v241 = vld [vmem:[%s216 + $0x68] sm:$0xff]
      %v242 = vld [vmem:[%s216 + $0x70] sm:$0xff]
      %v243 = vld [vmem:[%s216 + $0x78] sm:$0xff]
      %v244 = vld [vmem:[%s216 + $0x80] sm:$0xff]
      %v245 = vld [vmem:[%s216 + $0x88] sm:$0xff]
      %v246 = vld [vmem:[%s216 + $0x90] sm:$0xff]
      %v247 = vld [vmem:[%s216 + $0x98] sm:$0xff]
      %v248 = vld [vmem:[%s216 + $0xa0] sm:$0xff]
      %v249 = vld [vmem:[%s216 + $0xa8] sm:$0xff]
      %v250 = vld [vmem:[%s216 + $0xb0] sm:$0xff]
      %v251 = vld [vmem:[%s216 + $0xb8] sm:$0xff]
      %v252 = vld [vmem:[%s216 + $0xc0] sm:$0xff]
      %v253 = vld [vmem:[%s216 + $0xc8] sm:$0xff]
      %v254 = vld [vmem:[%s216 + $0xd0] sm:$0xff]
      %v255 = vld [vmem:[%s216 + $0xd8] sm:$0xff]
      %v256 = vld [vmem:[%s216 + $0xe0] sm:$0xff]
      %v257 = vld [vmem:[%s216 + $0xe8] sm:$0xff]
      %v258 = vld [vmem:[%s216 + $0xf0] sm:$0xff]
      %v259 = vld [vmem:[%s216 + $0xf8] sm:$0xff]
      %vm260 = vcmask 64512
      %v261 = vsel %vm260, %v228, 0.0
      %v262 = vsel %vm260, %v229, 0.0
      %v263 = vadd.f32 %v261, %v262
      %v264 = vsel %vm260, %v230, 0.0
      %v265 = vadd.f32 %v263, %v264
      %v266 = vsel %vm260, %v231, 0.0
      %v267 = vadd.f32 %v265, %v266
      %v268 = vsel %vm260, %v232, 0.0
      %v269 = vadd.f32 %v267, %v268
      %v270 = vsel %vm260, %v233, 0.0
      %v271 = vadd.f32 %v269, %v270
      %v272 = vsel %vm260, %v234, 0.0
      %v273 = vadd.f32 %v271, %v272
      %v274 = vsel %vm260, %v235, 0.0
      %v275 = vadd.f32 %v273, %v274
      %v276 = vsel %vm260, %v236, 0.0
      %v277 = vadd.f32 %v275, %v276
      %v278 = vsel %vm260, %v237, 0.0
      %v279 = vadd.f32 %v277, %v278
      %v280 = vsel %vm260, %v238, 0.0
      %v281 = vadd.f32 %v279, %v280
      %v282 = vsel %vm260, %v239, 0.0
      %v283 = vadd.f32 %v281, %v282
      %v284 = vsel %vm260, %v240, 0.0
      %v285 = vadd.f32 %v283, %v284
      %v286 = vsel %vm260, %v241, 0.0
      %v287 = vadd.f32 %v285, %v286
      %v288 = vsel %vm260, %v242, 0.0
      %v289 = vadd.f32 %v287, %v288
      %v290 = vsel %vm260, %v243, 0.0
      %v291 = vadd.f32 %v289, %v290
      %v292 = vsel %vm260, %v244, 0.0
      %v293 = vadd.f32 %v291, %v292
      %v294 = vsel %vm260, %v245, 0.0
      %v295 = vadd.f32 %v293, %v294
      %v296 = vsel %vm260, %v246, 0.0
      %v297 = vadd.f32 %v295, %v296
      %v298 = vsel %vm260, %v247, 0.0
      %v299 = vadd.f32 %v297, %v298
      %v300 = vsel %vm260, %v248, 0.0
      %v301 = vadd.f32 %v299, %v300
      %v302 = vsel %vm260, %v249, 0.0
      %v303 = vadd.f32 %v301, %v302
      %v304 = vsel %vm260, %v250, 0.0
      %v305 = vadd.f32 %v303, %v304
      %v306 = vsel %vm260, %v251, 0.0
      %v307 = vadd.f32 %v305, %v306
      %v308 = vsel %vm260, %v252, 0.0
      %v309 = vadd.f32 %v307, %v308
      %v310 = vsel %vm260, %v253, 0.0
      %v311 = vadd.f32 %v309, %v310
      %v312 = vsel %vm260, %v254, 0.0
      %v313 = vadd.f32 %v311, %v312
      %v314 = vsel %vm260, %v255, 0.0
      %v315 = vadd.f32 %v313, %v314
      %v316 = vsel %vm260, %v256, 0.0
      %v317 = vadd.f32 %v315, %v316
      %v318 = vsel %vm260, %v257, 0.0
      %v319 = vadd.f32 %v317, %v318
      %v320 = vsel %vm260, %v258, 0.0
      %v321 = vadd.f32 %v319, %v320
      %v322 = vsel %vm260, %v259, 0.0
      %v323 = vadd.f32 %v321, %v322
      %v324 = vrcp.pop 32.0
      %v325 = vmul.f32 %v323, %v324
      %v326 = vsub.f32 %v228, %v325
      %v327 = vsub.f32 %v229, %v325
      %v328 = vsub.f32 %v230, %v325
      %v329 = vsub.f32 %v231, %v325
      %v330 = vsub.f32 %v232, %v325
      %v331 = vsub.f32 %v233, %v325
      %v332 = vsub.f32 %v234, %v325
      %v333 = vsub.f32 %v235, %v325
      %v334 = vsub.f32 %v236, %v325
      %v335 = vsub.f32 %v237, %v325
      %v336 = vsub.f32 %v238, %v325
      %v337 = vsub.f32 %v239, %v325
      %v338 = vsub.f32 %v240, %v325
      %v339 = vsub.f32 %v241, %v325
      %v340 = vsub.f32 %v242, %v325
      %v341 = vsub.f32 %v243, %v325
      %v342 = vsub.f32 %v244, %v325
      %v343 = vsub.f32 %v245, %v325
      %v344 = vsub.f32 %v246, %v325
      %v345 = vsub.f32 %v247, %v325
      %v346 = vsub.f32 %v248, %v325
      %v347 = vsub.f32 %v249, %v325
      %v348 = vsub.f32 %v250, %v325
      %v349 = vsub.f32 %v251, %v325
      %v350 = vsub.f32 %v252, %v325
      %v351 = vsub.f32 %v253, %v325
      %v352 = vsub.f32 %v254, %v325
      %v353 = vsub.f32 %v255, %v325
      %v354 = vsub.f32 %v256, %v325
      %v355 = vsub.f32 %v257, %v325
      %v356 = vsub.f32 %v258, %v325
      %v357 = vsub.f32 %v259, %v325
      %v358 = vmul.f32 %v326, %v326
      %v359 = vmul.f32 %v327, %v327
      %v360 = vmul.f32 %v328, %v328
      %v361 = vmul.f32 %v329, %v329
      %v362 = vmul.f32 %v330, %v330
      %v363 = vmul.f32 %v331, %v331
      %v364 = vmul.f32 %v332, %v332
      %v365 = vmul.f32 %v333, %v333
      %v366 = vmul.f32 %v334, %v334
      %v367 = vmul.f32 %v335, %v335
      %v368 = vmul.f32 %v336, %v336
      %v369 = vmul.f32 %v337, %v337
      %v370 = vmul.f32 %v338, %v338
      %v371 = vmul.f32 %v339, %v339
      %v372 = vmul.f32 %v340, %v340
      %v373 = vmul.f32 %v341, %v341
      %v374 = vmul.f32 %v342, %v342
      %v375 = vmul.f32 %v343, %v343
      %v376 = vmul.f32 %v344, %v344
      %v377 = vmul.f32 %v345, %v345
      %v378 = vmul.f32 %v346, %v346
      %v379 = vmul.f32 %v347, %v347
      %v380 = vmul.f32 %v348, %v348
      %v381 = vmul.f32 %v349, %v349
      %v382 = vmul.f32 %v350, %v350
      %v383 = vmul.f32 %v351, %v351
      %v384 = vmul.f32 %v352, %v352
      %v385 = vmul.f32 %v353, %v353
      %v386 = vmul.f32 %v354, %v354
      %v387 = vmul.f32 %v355, %v355
      %v388 = vmul.f32 %v356, %v356
      %v389 = vmul.f32 %v357, %v357
      %v390 = vsel %vm260, %v358, 0.0
      %v391 = vsel %vm260, %v359, 0.0
      %v392 = vadd.f32 %v390, %v391
      %v393 = vsel %vm260, %v360, 0.0
      %v394 = vadd.f32 %v392, %v393
      %v395 = vsel %vm260, %v361, 0.0
      %v396 = vadd.f32 %v394, %v395
      %v397 = vsel %vm260, %v362, 0.0
      %v398 = vadd.f32 %v396, %v397
      %v399 = vsel %vm260, %v363, 0.0
      %v400 = vadd.f32 %v398, %v399
      %v401 = vsel %vm260, %v364, 0.0
      %v402 = vadd.f32 %v400, %v401
      %v403 = vsel %vm260, %v365, 0.0
      %v404 = vadd.f32 %v402, %v403
      %v405 = vsel %vm260, %v366, 0.0
      %v406 = vadd.f32 %v404, %v405
      %v407 = vsel %vm260, %v367, 0.0
      %v408 = vadd.f32 %v406, %v407
      %v409 = vsel %vm260, %v368, 0.0
      %v410 = vadd.f32 %v408, %v409
      %v411 = vsel %vm260, %v369, 0.0
      %v412 = vadd.f32 %v410, %v411
      %v413 = vsel %vm260, %v370, 0.0
      %v414 = vadd.f32 %v412, %v413
      %v415 = vsel %vm260, %v371, 0.0
      %v416 = vadd.f32 %v414, %v415
      %v417 = vsel %vm260, %v372, 0.0
      %v418 = vadd.f32 %v416, %v417
      %v419 = vsel %vm260, %v373, 0.0
      %v420 = vadd.f32 %v418, %v419
      %v421 = vsel %vm260, %v374, 0.0
      %v422 = vadd.f32 %v420, %v421
      %v423 = vsel %vm260, %v375, 0.0
      %v424 = vadd.f32 %v422, %v423
      %v425 = vsel %vm260, %v376, 0.0
      %v426 = vadd.f32 %v424, %v425
      %v427 = vsel %vm260, %v377, 0.0
      %v428 = vadd.f32 %v426, %v427
      %v429 = vsel %vm260, %v378, 0.0
      %v430 = vadd.f32 %v428, %v429
      %v431 = vsel %vm260, %v379, 0.0
      %v432 = vadd.f32 %v430, %v431
      %v433 = vsel %vm260, %v380, 0.0
      %v434 = vadd.f32 %v432, %v433
      %v435 = vsel %vm260, %v381, 0.0
      %v436 = vadd.f32 %v434, %v435
      %v437 = vsel %vm260, %v382, 0.0
      %v438 = vadd.f32 %v436, %v437
      %v439 = vsel %vm260, %v383, 0.0
      %v440 = vadd.f32 %v438, %v439
      %v441 = vsel %vm260, %v384, 0.0
      %v442 = vadd.f32 %v440, %v441
      %v443 = vsel %vm260, %v385, 0.0
      %v444 = vadd.f32 %v442, %v443
      %v445 = vsel %vm260, %v386, 0.0
      %v446 = vadd.f32 %v444, %v445
      %v447 = vsel %vm260, %v387, 0.0
      %v448 = vadd.f32 %v446, %v447
      %v449 = vsel %vm260, %v388, 0.0
      %v450 = vadd.f32 %v448, %v449
      %v451 = vsel %vm260, %v389, 0.0
      %v452 = vadd.f32 %v450, %v451
      %v453 = vmul.f32 %v452, %v324
      %v454 = vadd.f32 %v453, 1e-05
      %v455 = vrsqrt.pop %v454
      %v456 = vld [vmem:[%s1] sm:$0x1]
      %v457 = vld [vmem:[%s1 + $0x1] sm:$0x1]
      %v458 = vld [vmem:[%s1 + $0x2] sm:$0x1]
      %v459 = vld [vmem:[%s1 + $0x3] sm:$0x1]
      %v460 = vld [vmem:[%s1 + $0x4] sm:$0x1]
      %v461 = vld [vmem:[%s1 + $0x5] sm:$0x1]
      %v462 = vld [vmem:[%s1 + $0x6] sm:$0x1]
      %v463 = vld [vmem:[%s1 + $0x7] sm:$0x1]
      %v464 = vld [vmem:[%s1 + $0x8] sm:$0x1]
      %v465 = vld [vmem:[%s1 + $0x9] sm:$0x1]
      %v466 = vld [vmem:[%s1 + $0xa] sm:$0x1]
      %v467 = vld [vmem:[%s1 + $0xb] sm:$0x1]
      %v468 = vld [vmem:[%s1 + $0xc] sm:$0x1]
      %v469 = vld [vmem:[%s1 + $0xd] sm:$0x1]
      %v470 = vld [vmem:[%s1 + $0xe] sm:$0x1]
      %v471 = vld [vmem:[%s1 + $0xf] sm:$0x1]
      %v472 = vld [vmem:[%s1 + $0x10] sm:$0x1]
      %v473 = vld [vmem:[%s1 + $0x11] sm:$0x1]
      %v474 = vld [vmem:[%s1 + $0x12] sm:$0x1]
      %v475 = vld [vmem:[%s1 + $0x13] sm:$0x1]
      %v476 = vld [vmem:[%s1 + $0x14] sm:$0x1]
      %v477 = vld [vmem:[%s1 + $0x15] sm:$0x1]
      %v478 = vld [vmem:[%s1 + $0x16] sm:$0x1]
      %v479 = vld [vmem:[%s1 + $0x17] sm:$0x1]
      %v480 = vld [vmem:[%s1 + $0x18] sm:$0x1]
      %v481 = vld [vmem:[%s1 + $0x19] sm:$0x1]
      %v482 = vld [vmem:[%s1 + $0x1a] sm:$0x1]
      %v483 = vld [vmem:[%s1 + $0x1b] sm:$0x1]
      %v484 = vld [vmem:[%s1 + $0x1c] sm:$0x1]
      %v485 = vld [vmem:[%s1 + $0x1d] sm:$0x1]
      %v486 = vld [vmem:[%s1 + $0x1e] sm:$0x1]
      %v487 = vld [vmem:[%s1 + $0x1f] sm:$0x1]
      %v488 = vld [vmem:[%s2] sm:$0x1]
      %v489 = vld [vmem:[%s2 + $0x1] sm:$0x1]
      %v490 = vld [vmem:[%s2 + $0x2] sm:$0x1]
      %v491 = vld [vmem:[%s2 + $0x3] sm:$0x1]
      %v492 = vld [vmem:[%s2 + $0x4] sm:$0x1]
      %v493 = vld [vmem:[%s2 + $0x5] sm:$0x1]
      %v494 = vld [vmem:[%s2 + $0x6] sm:$0x1]
      %v495 = vld [vmem:[%s2 + $0x7] sm:$0x1]
      %v496 = vld [vmem:[%s2 + $0x8] sm:$0x1]
      %v497 = vld [vmem:[%s2 + $0x9] sm:$0x1]
      %v498 = vld [vmem:[%s2 + $0xa] sm:$0x1]
      %v499 = vld [vmem:[%s2 + $0xb] sm:$0x1]
      %v500 = vld [vmem:[%s2 + $0xc] sm:$0x1]
      %v501 = vld [vmem:[%s2 + $0xd] sm:$0x1]
      %v502 = vld [vmem:[%s2 + $0xe] sm:$0x1]
      %v503 = vld [vmem:[%s2 + $0xf] sm:$0x1]
      %v504 = vld [vmem:[%s2 + $0x10] sm:$0x1]
      %v505 = vld [vmem:[%s2 + $0x11] sm:$0x1]
      %v506 = vld [vmem:[%s2 + $0x12] sm:$0x1]
      %v507 = vld [vmem:[%s2 + $0x13] sm:$0x1]
      %v508 = vld [vmem:[%s2 + $0x14] sm:$0x1]
      %v509 = vld [vmem:[%s2 + $0x15] sm:$0x1]
      %v510 = vld [vmem:[%s2 + $0x16] sm:$0x1]
      %v511 = vld [vmem:[%s2 + $0x17] sm:$0x1]
      %v512 = vld [vmem:[%s2 + $0x18] sm:$0x1]
      %v513 = vld [vmem:[%s2 + $0x19] sm:$0x1]
      %v514 = vld [vmem:[%s2 + $0x1a] sm:$0x1]
      %v515 = vld [vmem:[%s2 + $0x1b] sm:$0x1]
      %v516 = vld [vmem:[%s2 + $0x1c] sm:$0x1]
      %v517 = vld [vmem:[%s2 + $0x1d] sm:$0x1]
      %v518 = vld [vmem:[%s2 + $0x1e] sm:$0x1]
      %v519 = vld [vmem:[%s2 + $0x1f] sm:$0x1]
      %v520 = vmul.f32 %v326, %v455
      %v521 = vmul.f32 %v327, %v455
      %v522 = vmul.f32 %v328, %v455
      %v523 = vmul.f32 %v329, %v455
      %v524 = vmul.f32 %v330, %v455
      %v525 = vmul.f32 %v331, %v455
      %v526 = vmul.f32 %v332, %v455
      %v527 = vmul.f32 %v333, %v455
      %v528 = vmul.f32 %v334, %v455
      %v529 = vmul.f32 %v335, %v455
      %v530 = vmul.f32 %v336, %v455
      %v531 = vmul.f32 %v337, %v455
      %v532 = vmul.f32 %v338, %v455
      %v533 = vmul.f32 %v339, %v455
      %v534 = vmul.f32 %v340, %v455
      %v535 = vmul.f32 %v341, %v455
      %v536 = vmul.f32 %v342, %v455
      %v537 = vmul.f32 %v343, %v455
      %v538 = vmul.f32 %v344, %v455
      %v539 = vmul.f32 %v345, %v455
      %v540 = vmul.f32 %v346, %v455
      %v541 = vmul.f32 %v347, %v455
      %v542 = vmul.f32 %v348, %v455
      %v543 = vmul.f32 %v349, %v455
      %v544 = vmul.f32 %v350, %v455
      %v545 = vmul.f32 %v351, %v455
      %v546 = vmul.f32 %v352, %v455
      %v547 = vmul.f32 %v353, %v455
      %v548 = vmul.f32 %v354, %v455
      %v549 = vmul.f32 %v355, %v455
      %v550 = vmul.f32 %v356, %v455
      %v551 = vmul.f32 %v357, %v455
      %v584 = vlaneseq
      %v585 = vshrl.u32 %v584, 7
      %v586 = vsub.s32 0, %v585
      %v587 = vrot.slane %v456, %v586
      %v588 = vlaneseq
      %v589 = vshrl.u32 %v588, 7
      %v590 = vsub.s32 0, %v589
      %v591 = vrot.slane %v457, %v590
      %v592 = vlaneseq
      %v593 = vshrl.u32 %v592, 7
      %v594 = vsub.s32 0, %v593
      %v595 = vrot.slane %v458, %v594
      %v596 = vlaneseq
      %v597 = vshrl.u32 %v596, 7
      %v598 = vsub.s32 0, %v597
      %v599 = vrot.slane %v459, %v598
      %v600 = vlaneseq
      %v601 = vshrl.u32 %v600, 7
      %v602 = vsub.s32 0, %v601
      %v603 = vrot.slane %v460, %v602
      %v604 = vlaneseq
      %v605 = vshrl.u32 %v604, 7
      %v606 = vsub.s32 0, %v605
      %v607 = vrot.slane %v461, %v606
      %v608 = vlaneseq
      %v609 = vshrl.u32 %v608, 7
      %v610 = vsub.s32 0, %v609
      %v611 = vrot.slane %v462, %v610
      %v612 = vlaneseq
      %v613 = vshrl.u32 %v612, 7
      %v614 = vsub.s32 0, %v613
      %v615 = vrot.slane %v463, %v614
      %v616 = vlaneseq
      %v617 = vshrl.u32 %v616, 7
      %v618 = vsub.s32 0, %v617
      %v619 = vrot.slane %v464, %v618
      %v620 = vlaneseq
      %v621 = vshrl.u32 %v620, 7
      %v622 = vsub.s32 0, %v621
      %v623 = vrot.slane %v465, %v622
      %v624 = vlaneseq
      %v625 = vshrl.u32 %v624, 7
      %v626 = vsub.s32 0, %v625
      %v627 = vrot.slane %v466, %v626
      %v628 = vlaneseq
      %v629 = vshrl.u32 %v628, 7
      %v630 = vsub.s32 0, %v629
      %v631 = vrot.slane %v467, %v630
      %v632 = vlaneseq
      %v633 = vshrl.u32 %v632, 7
      %v634 = vsub.s32 0, %v633
      %v635 = vrot.slane %v468, %v634
      %v636 = vlaneseq
      %v637 = vshrl.u32 %v636, 7
      %v638 = vsub.s32 0, %v637
      %v639 = vrot.slane %v469, %v638
      %v640 = vlaneseq
      %v641 = vshrl.u32 %v640, 7
      %v642 = vsub.s32 0, %v641
      %v643 = vrot.slane %v470, %v642
      %v644 = vlaneseq
      %v645 = vshrl.u32 %v644, 7
      %v646 = vsub.s32 0, %v645
      %v647 = vrot.slane %v471, %v646
      %v648 = vlaneseq
      %v649 = vshrl.u32 %v648, 7
      %v650 = vsub.s32 0, %v649
      %v651 = vrot.slane %v472, %v650
      %v652 = vlaneseq
      %v653 = vshrl.u32 %v652, 7
      %v654 = vsub.s32 0, %v653
      %v655 = vrot.slane %v473, %v654
      %v656 = vlaneseq
      %v657 = vshrl.u32 %v656, 7
      %v658 = vsub.s32 0, %v657
      %v659 = vrot.slane %v474, %v658
      %v660 = vlaneseq
      %v661 = vshrl.u32 %v660, 7
      %v662 = vsub.s32 0, %v661
      %v663 = vrot.slane %v475, %v662
      %v664 = vlaneseq
      %v665 = vshrl.u32 %v664, 7
      %v666 = vsub.s32 0, %v665
      %v667 = vrot.slane %v476, %v666
      %v668 = vlaneseq
      %v669 = vshrl.u32 %v668, 7
      %v670 = vsub.s32 0, %v669
      %v671 = vrot.slane %v477, %v670
      %v672 = vlaneseq
      %v673 = vshrl.u32 %v672, 7
      %v674 = vsub.s32 0, %v673
      %v675 = vrot.slane %v478, %v674
      %v676 = vlaneseq
      %v677 = vshrl.u32 %v676, 7
      %v678 = vsub.s32 0, %v677
      %v679 = vrot.slane %v479, %v678
      %v680 = vlaneseq
      %v681 = vshrl.u32 %v680, 7
      %v682 = vsub.s32 0, %v681
      %v683 = vrot.slane %v480, %v682
      %v684 = vlaneseq
      %v685 = vshrl.u32 %v684, 7
      %v686 = vsub.s32 0, %v685
      %v687 = vrot.slane %v481, %v686
      %v688 = vlaneseq
      %v689 = vshrl.u32 %v688, 7
      %v690 = vsub.s32 0, %v689
      %v691 = vrot.slane %v482, %v690
      %v692 = vlaneseq
      %v693 = vshrl.u32 %v692, 7
      %v694 = vsub.s32 0, %v693
      %v695 = vrot.slane %v483, %v694
      %v696 = vlaneseq
      %v697 = vshrl.u32 %v696, 7
      %v698 = vsub.s32 0, %v697
      %v699 = vrot.slane %v484, %v698
      %v700 = vlaneseq
      %v701 = vshrl.u32 %v700, 7
      %v702 = vsub.s32 0, %v701
      %v703 = vrot.slane %v485, %v702
      %v704 = vlaneseq
      %v705 = vshrl.u32 %v704, 7
      %v706 = vsub.s32 0, %v705
      %v707 = vrot.slane %v486, %v706
      %v708 = vlaneseq
      %v709 = vshrl.u32 %v708, 7
      %v710 = vsub.s32 0, %v709
      %v711 = vrot.slane %v487, %v710
      %712 = vset.pattern.permute.xlu0 0
      %713 = vperm.xlu0 %712, %v587
      %v714 = vpop.permute.xlu0 %713
      %716 = vset.pattern.permute.xlu0 0
      %717 = vperm.xlu0 %716, %v591
      %v718 = vpop.permute.xlu0 %717
      %720 = vset.pattern.permute.xlu0 0
      %721 = vperm.xlu0 %720, %v595
      %v722 = vpop.permute.xlu0 %721
      %724 = vset.pattern.permute.xlu0 0
      %725 = vperm.xlu0 %724, %v599
      %v726 = vpop.permute.xlu0 %725
      %728 = vset.pattern.permute.xlu0 0
      %729 = vperm.xlu0 %728, %v603
      %v730 = vpop.permute.xlu0 %729
      %732 = vset.pattern.permute.xlu0 0
      %733 = vperm.xlu0 %732, %v607
      %v734 = vpop.permute.xlu0 %733
      %736 = vset.pattern.permute.xlu0 0
      %737 = vperm.xlu0 %736, %v611
      %v738 = vpop.permute.xlu0 %737
      %740 = vset.pattern.permute.xlu0 0
      %741 = vperm.xlu0 %740, %v615
      %v742 = vpop.permute.xlu0 %741
      %744 = vset.pattern.permute.xlu0 0
      %745 = vperm.xlu0 %744, %v619
      %v746 = vpop.permute.xlu0 %745
      %748 = vset.pattern.permute.xlu0 0
      %749 = vperm.xlu0 %748, %v623
      %v750 = vpop.permute.xlu0 %749
      %752 = vset.pattern.permute.xlu0 0
      %753 = vperm.xlu0 %752, %v627
      %v754 = vpop.permute.xlu0 %753
      %756 = vset.pattern.permute.xlu0 0
      %757 = vperm.xlu0 %756, %v631
      %v758 = vpop.permute.xlu0 %757
      %760 = vset.pattern.permute.xlu0 0
      %761 = vperm.xlu0 %760, %v635
      %v762 = vpop.permute.xlu0 %761
      %764 = vset.pattern.permute.xlu0 0
      %765 = vperm.xlu0 %764, %v639
      %v766 = vpop.permute.xlu0 %765
      %768 = vset.pattern.permute.xlu0 0
      %769 = vperm.xlu0 %768, %v643
      %v770 = vpop.permute.xlu0 %769
      %772 = vset.pattern.permute.xlu0 0
      %773 = vperm.xlu0 %772, %v647
      %v774 = vpop.permute.xlu0 %773
      %776 = vset.pattern.permute.xlu0 0
      %777 = vperm.xlu0 %776, %v651
      %v778 = vpop.permute.xlu0 %777
      %780 = vset.pattern.permute.xlu0 0
      %781 = vperm.xlu0 %780, %v655
      %v782 = vpop.permute.xlu0 %781
      %784 = vset.pattern.permute.xlu0 0
      %785 = vperm.xlu0 %784, %v659
      %v786 = vpop.permute.xlu0 %785
      %788 = vset.pattern.permute.xlu0 0
      %789 = vperm.xlu0 %788, %v663
      %v790 = vpop.permute.xlu0 %789
      %792 = vset.pattern.permute.xlu0 0
      %793 = vperm.xlu0 %792, %v667
      %v794 = vpop.permute.xlu0 %793
      %796 = vset.pattern.permute.xlu0 0
      %797 = vperm.xlu0 %796, %v671
      %v798 = vpop.permute.xlu0 %797
      %800 = vset.pattern.permute.xlu0 0
      %801 = vperm.xlu0 %800, %v675
      %v802 = vpop.permute.xlu0 %801
      %804 = vset.pattern.permute.xlu0 0
      %805 = vperm.xlu0 %804, %v679
      %v806 = vpop.permute.xlu0 %805
      %808 = vset.pattern.permute.xlu0 0
      %809 = vperm.xlu0 %808, %v683
      %v810 = vpop.permute.xlu0 %809
      %812 = vset.pattern.permute.xlu0 0
      %813 = vperm.xlu0 %812, %v687
      %v814 = vpop.permute.xlu0 %813
      %816 = vset.pattern.permute.xlu0 0
      %817 = vperm.xlu0 %816, %v691
      %v818 = vpop.permute.xlu0 %817
      %820 = vset.pattern.permute.xlu0 0
      %821 = vperm.xlu0 %820, %v695
      %v822 = vpop.permute.xlu0 %821
      %824 = vset.pattern.permute.xlu0 0
      %825 = vperm.xlu0 %824, %v699
      %v826 = vpop.permute.xlu0 %825
      %828 = vset.pattern.permute.xlu0 0
      %829 = vperm.xlu0 %828, %v703
      %v830 = vpop.permute.xlu0 %829
      %832 = vset.pattern.permute.xlu0 0
      %833 = vperm.xlu0 %832, %v707
      %v834 = vpop.permute.xlu0 %833
      %836 = vset.pattern.permute.xlu0 0
      %837 = vperm.xlu0 %836, %v711
      %v838 = vpop.permute.xlu0 %837
      %v840 = vmul.f32 %v520, %v714
      %v841 = vmul.f32 %v521, %v718
      %v842 = vmul.f32 %v522, %v722
      %v843 = vmul.f32 %v523, %v726
      %v844 = vmul.f32 %v524, %v730
      %v845 = vmul.f32 %v525, %v734
      %v846 = vmul.f32 %v526, %v738
      %v847 = vmul.f32 %v527, %v742
      %v848 = vmul.f32 %v528, %v746
      %v849 = vmul.f32 %v529, %v750
      %v850 = vmul.f32 %v530, %v754
      %v851 = vmul.f32 %v531, %v758
      %v852 = vmul.f32 %v532, %v762
      %v853 = vmul.f32 %v533, %v766
      %v854 = vmul.f32 %v534, %v770
      %v855 = vmul.f32 %v535, %v774
      %v856 = vmul.f32 %v536, %v778
      %v857 = vmul.f32 %v537, %v782
      %v858 = vmul.f32 %v538, %v786
      %v859 = vmul.f32 %v539, %v790
      %v860 = vmul.f32 %v540, %v794
      %v861 = vmul.f32 %v541, %v798
      %v862 = vmul.f32 %v542, %v802
      %v863 = vmul.f32 %v543, %v806
      %v864 = vmul.f32 %v544, %v810
      %v865 = vmul.f32 %v545, %v814
      %v866 = vmul.f32 %v546, %v818
      %v867 = vmul.f32 %v547, %v822
      %v868 = vmul.f32 %v548, %v826
      %v869 = vmul.f32 %v549, %v830
      %v870 = vmul.f32 %v550, %v834
      %v871 = vmul.f32 %v551, %v838
      %v904 = vlaneseq
      %v905 = vshrl.u32 %v904, 7
      %v906 = vsub.s32 0, %v905
      %v907 = vrot.slane %v488, %v906
      %v908 = vlaneseq
      %v909 = vshrl.u32 %v908, 7
      %v910 = vsub.s32 0, %v909
      %v911 = vrot.slane %v489, %v910
      %v912 = vlaneseq
      %v913 = vshrl.u32 %v912, 7
      %v914 = vsub.s32 0, %v913
      %v915 = vrot.slane %v490, %v914
      %v916 = vlaneseq
      %v917 = vshrl.u32 %v916, 7
      %v918 = vsub.s32 0, %v917
      %v919 = vrot.slane %v491, %v918
      %v920 = vlaneseq
      %v921 = vshrl.u32 %v920, 7
      %v922 = vsub.s32 0, %v921
      %v923 = vrot.slane %v492, %v922
      %v924 = vlaneseq
      %v925 = vshrl.u32 %v924, 7
      %v926 = vsub.s32 0, %v925
      %v927 = vrot.slane %v493, %v926
      %v928 = vlaneseq
      %v929 = vshrl.u32 %v928, 7
      %v930 = vsub.s32 0, %v929
      %v931 = vrot.slane %v494, %v930
      %v932 = vlaneseq
      %v933 = vshrl.u32 %v932, 7
      %v934 = vsub.s32 0, %v933
      %v935 = vrot.slane %v495, %v934
      %v936 = vlaneseq
      %v937 = vshrl.u32 %v936, 7
      %v938 = vsub.s32 0, %v937
      %v939 = vrot.slane %v496, %v938
      %v940 = vlaneseq
      %v941 = vshrl.u32 %v940, 7
      %v942 = vsub.s32 0, %v941
      %v943 = vrot.slane %v497, %v942
      %v944 = vlaneseq
      %v945 = vshrl.u32 %v944, 7
      %v946 = vsub.s32 0, %v945
      %v947 = vrot.slane %v498, %v946
      %v948 = vlaneseq
      %v949 = vshrl.u32 %v948, 7
      %v950 = vsub.s32 0, %v949
      %v951 = vrot.slane %v499, %v950
      %v952 = vlaneseq
      %v953 = vshrl.u32 %v952, 7
      %v954 = vsub.s32 0, %v953
      %v955 = vrot.slane %v500, %v954
      %v956 = vlaneseq
      %v957 = vshrl.u32 %v956, 7
      %v958 = vsub.s32 0, %v957
      %v959 = vrot.slane %v501, %v958
      %v960 = vlaneseq
      %v961 = vshrl.u32 %v960, 7
      %v962 = vsub.s32 0, %v961
      %v963 = vrot.slane %v502, %v962
      %v964 = vlaneseq
      %v965 = vshrl.u32 %v964, 7
      %v966 = vsub.s32 0, %v965
      %v967 = vrot.slane %v503, %v966
      %v968 = vlaneseq
      %v969 = vshrl.u32 %v968, 7
      %v970 = vsub.s32 0, %v969
      %v971 = vrot.slane %v504, %v970
      %v972 = vlaneseq
      %v973 = vshrl.u32 %v972, 7
      %v974 = vsub.s32 0, %v973
      %v975 = vrot.slane %v505, %v974
      %v976 = vlaneseq
      %v977 = vshrl.u32 %v976, 7
      %v978 = vsub.s32 0, %v977
      %v979 = vrot.slane %v506, %v978
      %v980 = vlaneseq
      %v981 = vshrl.u32 %v980, 7
      %v982 = vsub.s32 0, %v981
      %v983 = vrot.slane %v507, %v982
      %v984 = vlaneseq
      %v985 = vshrl.u32 %v984, 7
      %v986 = vsub.s32 0, %v985
      %v987 = vrot.slane %v508, %v986
      %v988 = vlaneseq
      %v989 = vshrl.u32 %v988, 7
      %v990 = vsub.s32 0, %v989
      %v991 = vrot.slane %v509, %v990
      %v992 = vlaneseq
      %v993 = vshrl.u32 %v992, 7
      %v994 = vsub.s32 0, %v993
      %v995 = vrot.slane %v510, %v994
      %v996 = vlaneseq
      %v997 = vshrl.u32 %v996, 7
      %v998 = vsub.s32 0, %v997
      %v999 = vrot.slane %v511, %v998
      %v1000 = vlaneseq
      %v1001 = vshrl.u32 %v1000, 7
      %v1002 = vsub.s32 0, %v1001
      %v1003 = vrot.slane %v512, %v1002
      %v1004 = vlaneseq
      %v1005 = vshrl.u32 %v1004, 7
      %v1006 = vsub.s32 0, %v1005
      %v1007 = vrot.slane %v513, %v1006
      %v1008 = vlaneseq
      %v1009 = vshrl.u32 %v1008, 7
      %v1010 = vsub.s32 0, %v1009
      %v1011 = vrot.slane %v514, %v1010
      %v1012 = vlaneseq
      %v1013 = vshrl.u32 %v1012, 7
      %v1014 = vsub.s32 0, %v1013
      %v1015 = vrot.slane %v515, %v1014
      %v1016 = vlaneseq
      %v1017 = vshrl.u32 %v1016, 7
      %v1018 = vsub.s32 0, %v1017
      %v1019 = vrot.slane %v516, %v1018
      %v1020 = vlaneseq
      %v1021 = vshrl.u32 %v1020, 7
      %v1022 = vsub.s32 0, %v1021
      %v1023 = vrot.slane %v517, %v1022
      %v1024 = vlaneseq
      %v1025 = vshrl.u32 %v1024, 7
      %v1026 = vsub.s32 0, %v1025
      %v1027 = vrot.slane %v518, %v1026
      %v1028 = vlaneseq
      %v1029 = vshrl.u32 %v1028, 7
      %v1030 = vsub.s32 0, %v1029
      %v1031 = vrot.slane %v519, %v1030
      %1032 = vset.pattern.permute.xlu0 0
      %1033 = vperm.xlu0 %1032, %v907
      %v1034 = vpop.permute.xlu0 %1033
      %1036 = vset.pattern.permute.xlu0 0
      %1037 = vperm.xlu0 %1036, %v911
      %v1038 = vpop.permute.xlu0 %1037
      %1040 = vset.pattern.permute.xlu0 0
      %1041 = vperm.xlu0 %1040, %v915
      %v1042 = vpop.permute.xlu0 %1041
      %1044 = vset.pattern.permute.xlu0 0
      %1045 = vperm.xlu0 %1044, %v919
      %v1046 = vpop.permute.xlu0 %1045
      %1048 = vset.pattern.permute.xlu0 0
      %1049 = vperm.xlu0 %1048, %v923
      %v1050 = vpop.permute.xlu0 %1049
      %1052 = vset.pattern.permute.xlu0 0
      %1053 = vperm.xlu0 %1052, %v927
      %v1054 = vpop.permute.xlu0 %1053
      %1056 = vset.pattern.permute.xlu0 0
      %1057 = vperm.xlu0 %1056, %v931
      %v1058 = vpop.permute.xlu0 %1057
      %1060 = vset.pattern.permute.xlu0 0
      %1061 = vperm.xlu0 %1060, %v935
      %v1062 = vpop.permute.xlu0 %1061
      %1064 = vset.pattern.permute.xlu0 0
      %1065 = vperm.xlu0 %1064, %v939
      %v1066 = vpop.permute.xlu0 %1065
      %1068 = vset.pattern.permute.xlu0 0
      %1069 = vperm.xlu0 %1068, %v943
      %v1070 = vpop.permute.xlu0 %1069
      %1072 = vset.pattern.permute.xlu0 0
      %1073 = vperm.xlu0 %1072, %v947
      %v1074 = vpop.permute.xlu0 %1073
      %1076 = vset.pattern.permute.xlu0 0
      %1077 = vperm.xlu0 %1076, %v951
      %v1078 = vpop.permute.xlu0 %1077
      %1080 = vset.pattern.permute.xlu0 0
      %1081 = vperm.xlu0 %1080, %v955
      %v1082 = vpop.permute.xlu0 %1081
      %1084 = vset.pattern.permute.xlu0 0
      %1085 = vperm.xlu0 %1084, %v959
      %v1086 = vpop.permute.xlu0 %1085
      %1088 = vset.pattern.permute.xlu0 0
      %1089 = vperm.xlu0 %1088, %v963
      %v1090 = vpop.permute.xlu0 %1089
      %1092 = vset.pattern.permute.xlu0 0
      %1093 = vperm.xlu0 %1092, %v967
      %v1094 = vpop.permute.xlu0 %1093
      %1096 = vset.pattern.permute.xlu0 0
      %1097 = vperm.xlu0 %1096, %v971
      %v1098 = vpop.permute.xlu0 %1097
      %1100 = vset.pattern.permute.xlu0 0
      %1101 = vperm.xlu0 %1100, %v975
      %v1102 = vpop.permute.xlu0 %1101
      %1104 = vset.pattern.permute.xlu0 0
      %1105 = vperm.xlu0 %1104, %v979
      %v1106 = vpop.permute.xlu0 %1105
      %1108 = vset.pattern.permute.xlu0 0
      %1109 = vperm.xlu0 %1108, %v983
      %v1110 = vpop.permute.xlu0 %1109
      %1112 = vset.pattern.permute.xlu0 0
      %1113 = vperm.xlu0 %1112, %v987
      %v1114 = vpop.permute.xlu0 %1113
      %1116 = vset.pattern.permute.xlu0 0
      %1117 = vperm.xlu0 %1116, %v991
      %v1118 = vpop.permute.xlu0 %1117
      %1120 = vset.pattern.permute.xlu0 0
      %1121 = vperm.xlu0 %1120, %v995
      %v1122 = vpop.permute.xlu0 %1121
      %1124 = vset.pattern.permute.xlu0 0
      %1125 = vperm.xlu0 %1124, %v999
      %v1126 = vpop.permute.xlu0 %1125
      %1128 = vset.pattern.permute.xlu0 0
      %1129 = vperm.xlu0 %1128, %v1003
      %v1130 = vpop.permute.xlu0 %1129
      %1132 = vset.pattern.permute.xlu0 0
      %1133 = vperm.xlu0 %1132, %v1007
      %v1134 = vpop.permute.xlu0 %1133
      %1136 = vset.pattern.permute.xlu0 0
      %1137 = vperm.xlu0 %1136, %v1011
      %v1138 = vpop.permute.xlu0 %1137
      %1140 = vset.pattern.permute.xlu0 0
      %1141 = vperm.xlu0 %1140, %v1015
      %v1142 = vpop.permute.xlu0 %1141
      %1144 = vset.pattern.permute.xlu0 0
      %1145 = vperm.xlu0 %1144, %v1019
      %v1146 = vpop.permute.xlu0 %1145
      %1148 = vset.pattern.permute.xlu0 0
      %1149 = vperm.xlu0 %1148, %v1023
      %v1150 = vpop.permute.xlu0 %1149
      %1152 = vset.pattern.permute.xlu0 0
      %1153 = vperm.xlu0 %1152, %v1027
      %v1154 = vpop.permute.xlu0 %1153
      %1156 = vset.pattern.permute.xlu0 0
      %1157 = vperm.xlu0 %1156, %v1031
      %v1158 = vpop.permute.xlu0 %1157
      %v1160 = vadd.f32 %v840, %v1034
      %v1161 = vadd.f32 %v841, %v1038
      %v1162 = vadd.f32 %v842, %v1042
      %v1163 = vadd.f32 %v843, %v1046
      %v1164 = vadd.f32 %v844, %v1050
      %v1165 = vadd.f32 %v845, %v1054
      %v1166 = vadd.f32 %v846, %v1058
      %v1167 = vadd.f32 %v847, %v1062
      %v1168 = vadd.f32 %v848, %v1066
      %v1169 = vadd.f32 %v849, %v1070
      %v1170 = vadd.f32 %v850, %v1074
      %v1171 = vadd.f32 %v851, %v1078
      %v1172 = vadd.f32 %v852, %v1082
      %v1173 = vadd.f32 %v853, %v1086
      %v1174 = vadd.f32 %v854, %v1090
      %v1175 = vadd.f32 %v855, %v1094
      %v1176 = vadd.f32 %v856, %v1098
      %v1177 = vadd.f32 %v857, %v1102
      %v1178 = vadd.f32 %v858, %v1106
      %v1179 = vadd.f32 %v859, %v1110
      %v1180 = vadd.f32 %v860, %v1114
      %v1181 = vadd.f32 %v861, %v1118
      %v1182 = vadd.f32 %v862, %v1122
      %v1183 = vadd.f32 %v863, %v1126
      %v1184 = vadd.f32 %v864, %v1130
      %v1185 = vadd.f32 %v865, %v1134
      %v1186 = vadd.f32 %v866, %v1138
      %v1187 = vadd.f32 %v867, %v1142
      %v1188 = vadd.f32 %v868, %v1146
      %v1189 = vadd.f32 %v869, %v1150
      %v1190 = vadd.f32 %v870, %v1154
      %v1191 = vadd.f32 %v871, %v1158
      %1192 = vst.msk [vmem:[%s227] sm:$0xff] %vm260, %v1160
      %1193 = vst.msk [vmem:[%s227 + $0x8] sm:$0xff] %vm260, %v1161
      %1194 = vst.msk [vmem:[%s227 + $0x10] sm:$0xff] %vm260, %v1162
      %1195 = vst.msk [vmem:[%s227 + $0x18] sm:$0xff] %vm260, %v1163
      %1196 = vst.msk [vmem:[%s227 + $0x20] sm:$0xff] %vm260, %v1164
      %1197 = vst.msk [vmem:[%s227 + $0x28] sm:$0xff] %vm260, %v1165
      %1198 = vst.msk [vmem:[%s227 + $0x30] sm:$0xff] %vm260, %v1166
      %1199 = vst.msk [vmem:[%s227 + $0x38] sm:$0xff] %vm260, %v1167
      %1200 = vst.msk [vmem:[%s227 + $0x40] sm:$0xff] %vm260, %v1168
      %1201 = vst.msk [vmem:[%s227 + $0x48] sm:$0xff] %vm260, %v1169
      %1202 = vst.msk [vmem:[%s227 + $0x50] sm:$0xff] %vm260, %v1170
      %1203 = vst.msk [vmem:[%s227 + $0x58] sm:$0xff] %vm260, %v1171
      %1204 = vst.msk [vmem:[%s227 + $0x60] sm:$0xff] %vm260, %v1172
      %1205 = vst.msk [vmem:[%s227 + $0x68] sm:$0xff] %vm260, %v1173
      %1206 = vst.msk [vmem:[%s227 + $0x70] sm:$0xff] %vm260, %v1174
      %1207 = vst.msk [vmem:[%s227 + $0x78] sm:$0xff] %vm260, %v1175
      %1208 = vst.msk [vmem:[%s227 + $0x80] sm:$0xff] %vm260, %v1176
      %1209 = vst.msk [vmem:[%s227 + $0x88] sm:$0xff] %vm260, %v1177
      %1210 = vst.msk [vmem:[%s227 + $0x90] sm:$0xff] %vm260, %v1178
      %1211 = vst.msk [vmem:[%s227 + $0x98] sm:$0xff] %vm260, %v1179
      %1212 = vst.msk [vmem:[%s227 + $0xa0] sm:$0xff] %vm260, %v1180
      %1213 = vst.msk [vmem:[%s227 + $0xa8] sm:$0xff] %vm260, %v1181
      %1214 = vst.msk [vmem:[%s227 + $0xb0] sm:$0xff] %vm260, %v1182
      %1215 = vst.msk [vmem:[%s227 + $0xb8] sm:$0xff] %vm260, %v1183
      %1216 = vst.msk [vmem:[%s227 + $0xc0] sm:$0xff] %vm260, %v1184
      %1217 = vst.msk [vmem:[%s227 + $0xc8] sm:$0xff] %vm260, %v1185
      %1218 = vst.msk [vmem:[%s227 + $0xd0] sm:$0xff] %vm260, %v1186
      %1219 = vst.msk [vmem:[%s227 + $0xd8] sm:$0xff] %vm260, %v1187
      %1220 = vst.msk [vmem:[%s227 + $0xe0] sm:$0xff] %vm260, %v1188
      %1221 = vst.msk [vmem:[%s227 + $0xe8] sm:$0xff] %vm260, %v1189
      %1222 = vst.msk [vmem:[%s227 + $0xf0] sm:$0xff] %vm260, %v1190
      %1223 = vst.msk [vmem:[%s227 + $0xf8] sm:$0xff] %vm260, %v1191
      %p1224 = scmp.lt.s32.totalorder %s19, 1
      %s1225 = scalar_select %p1224, %s19, 1
      %p1226 = scmp.lt.s32.totalorder %s20, 0
      %s1227 = scalar_select %p1226, %s20, 0
      %p1228 = scmp.lt.s32.totalorder %s21, 0
      %s1229 = scalar_select %p1228, %s21, 0
      %s1230 = sadd.s32 %s1229, %s1227
      %s1231 = smul.addr %s1225, 32
      %s1232 = sadd.s32 %s1230, %s1231
      %s1233 = smul.addr %s1232, 8
      %s1234 = scalar_lea.vmem %s3, %s1233
      // Predicated region
      $region33: #{tpu_custom_call.1} parent=31 // pred_check
        %p1235 = pneg %p127
      $region34: #{tpu_custom_call.1} parent=31 // pred_check_branch
        %1237 = sbr.rel (%p1235) target = $region36
      $region35: #{tpu_custom_call.1} parent=31 // pred_region
        _
      $region36: #{tpu_custom_call.1} parent=31 // pred_fallthru
        _
    $region32: #{tpu_custom_call.1} parent=5 // pred_fallthru
      _
    %p1238 = scmp.le.s32.totalorder 2, %s9
    // Predicated region
    $region37: #{tpu_custom_call.1} parent=5 // pred_check
      %p1239 = pneg %p1238
    $region38: #{tpu_custom_call.1} parent=5 // pred_check_branch
      %1241 = sbr.rel (%p1239) target = $region40
    $region39: #{tpu_custom_call.1} parent=5 // pred_region
      %s1242 = ssub.s32 %s9, 2
      // Predicated region
      $region41: #{tpu_custom_call.1} parent=39 // pred_check
        %p1243 = pneg %p133
      $region42: #{tpu_custom_call.1} parent=39 // pred_check_branch
        %1245 = sbr.rel (%p1243) target = $region44
      $region43: #{tpu_custom_call.1} parent=39 // pred_region
        %p1246 = scmp.lt.s32.totalorder %s22, 1
        %s1247 = scalar_select %p1246, %s22, 1
        %p1248 = scmp.lt.s32.totalorder %s23, 0
        %s1249 = scalar_select %p1248, %s23, 0
        %p1250 = scmp.lt.s32.totalorder %s24, 0
        %s1251 = scalar_select %p1250, %s24, 0
        %s1252 = sadd.s32 %s1251, %s1249
        %s1253 = smul.addr %s1247, 32
        %s1254 = sadd.s32 %s1252, %s1253
        %s1255 = smul.addr %s1254, 8
        %s1256 = scalar_lea.vmem %s3, %s1255
      $region44: #{tpu_custom_call.1} parent=39 // pred_fallthru
        _
    $region40: #{tpu_custom_call.1} parent=5 // pred_fallthru
      _
  $region6: #{tpu_custom_call.1} parent=0 // loop_footer
    %s13 = sadd.s32 1, %s9
  $region7: #{tpu_custom_call.1} parent=0 // loop_footer_branch
    %8 = sbr.rel target = $region3
  $region8: #{tpu_custom_call.1} parent=0 // loop_exit
    _

</llo_original>
